<compile_context>
chip_gen: v5e
topology: v5e:2x2
jax: 0.10.0
libtpu: 0.0.40
codegen_flags: <defaults>
</compile_context>

<pallas_src>
import math

import numpy as np
import jax
import jax.numpy as jnp
from jax.experimental import pallas as pl
from jax.experimental.pallas import tpu as pltpu


# ---------------------------------------------------------------------------
# Pallas kernel: one row-tile of x times the (possibly block-diag-replicated)
# dense MPO weight, with the bias add fused into the epilogue.
# ---------------------------------------------------------------------------
def _mpo_matmul_kernel(x_ref, w_ref, b_ref, o_ref):
    acc = jnp.dot(x_ref[...], w_ref[...], preferred_element_type=jnp.float32)
    o_ref[...] = (acc + b_ref[...]).astype(o_ref.dtype)


# ---------------------------------------------------------------------------
# Pure-JAX replication of the PyTorch einsum chain on a (rows, in_feat) input.
# Used (a) to build the dense W from the identity and (b) as a reference.
# ---------------------------------------------------------------------------
def _mpo_apply_2d(x2d, weights, array_in, bond_dim, out_feat):
    dim = x2d.shape[0]
    n = len(array_in)
    output = x2d.reshape((dim,) + tuple(array_in))
    for i in range(n):
        if i == 0:
            output = jnp.einsum('abc,bmn->amcn',
                                output.reshape(dim, array_in[0], -1), weights[0])
        elif i == n - 1:
            output = jnp.einsum('abcd,cbm->adm',
                                output.reshape(dim, bond_dim, array_in[i], -1),
                                weights[i]).reshape(dim, out_feat)
        else:
            output = jnp.einsum('abcd,cbmn->andm',
                                output.reshape(dim, bond_dim, array_in[i], -1),
                                weights[i])
    return output


def mpo_dense_weight(weights, array_in, bond_dim, in_feat, out_feat):
    """Contract the MPO cores into the dense (in_feat, out_feat) weight.

    The forward chain is linear and row-independent, so pushing the identity
    through it yields exactly W with y_flat = x_flat @ W.  Tiny; compute once
    per parameter update and reuse across forward calls.
    """
    eye = jnp.eye(in_feat, dtype=jnp.float32)
    return _mpo_apply_2d(eye, weights, array_in, bond_dim, out_feat)


# ---------------------------------------------------------------------------
# Pallas-backed forward.
# ---------------------------------------------------------------------------
def mpo_forward(x, weights, array_in, array_out, bond_dim, in_feat, out_feat,
                bias=None, dense_w=None, tile_m=256, compute_dtype=jnp.bfloat16):
    """x: (..., in_feat) float32.  Returns (..., out_feat) float32."""
    assert x.shape[-1] == in_feat
    assert int(np.prod(array_in)) == in_feat and int(np.prod(array_out)) == out_feat
    batch_shape = x.shape[:-1]
    M = int(np.prod(batch_shape))
    K, N = in_feat, out_feat

    W = dense_w if dense_w is not None else mpo_dense_weight(
        weights, array_in, bond_dim, in_feat, out_feat)
    b = bias if bias is not None else jnp.zeros((out_feat,), jnp.float32)

    x2d = x.reshape(M, K)

    # --- lane-dense regrouping for narrow outputs (out_feat < 128) ----------
    # Group G consecutive rows into one super-row and replicate W on the block
    # diagonal so the output tile is >= 128 lanes wide (unmasked vst) and the
    # MXU contraction/output dims are >= 128.  Reshapes are free (row-major).
    G = 1
    if N < 128 and 128 % N == 0:
        g = 128 // N
        if M % g == 0 and K * N * g * g * 4 <= (8 << 20):
            G = g
    Mg, Kg, Ng = M // G, K * G, N * G
    xg = x2d.reshape(Mg, Kg)                             # free view
    if G > 1:
        Wg = jnp.kron(jnp.eye(G, dtype=W.dtype), W)      # block-diagonal replica
        bg = jnp.tile(b, G)
    else:
        Wg, bg = W, b
    bg = bg.reshape(1, Ng).astype(jnp.float32)

    # bf16 operands, f32 accumulation (output stays f32).
    xg = xg.astype(compute_dtype)
    Wg = Wg.astype(compute_dtype)

    tm = min(int(tile_m), Mg)          # full-extent row tile if the batch is small
    grid_m = int(pl.cdiv(Mg, tm))      # no jnp.pad: trailing partial tile is masked

    in_itemsize = jnp.dtype(compute_dtype).itemsize
    est_vmem = (2 * (tm * Kg + Kg * Ng) * in_itemsize   # double-buffered inputs
                + 2 * tm * Ng * 4 + Ng * 4)             # output + bias
    vmem_limit = None
    if est_vmem > (24 << 20):
        # leave headroom; cap at 64 MiB so the same tiling also fits v7x VMEM
        vmem_limit = int(min(est_vmem + (8 << 20), 64 << 20))

    cost = pl.CostEstimate(
        flops=2 * Mg * Kg * Ng,
        transcendentals=0,
        bytes_accessed=int((Mg * Kg + Kg * Ng) * in_itemsize + Mg * Ng * 4 + Ng * 4),
    )

    out = pl.pallas_call(
        _mpo_matmul_kernel,
        out_shape=jax.ShapeDtypeStruct((Mg, Ng), jnp.float32),
        grid_spec=pltpu.PrefetchScalarGridSpec(
            num_scalar_prefetch=0,
            grid=(grid_m,),
            in_specs=[
                pl.BlockSpec((tm, Kg), lambda i: (i, 0)),   # x row-tile
                pl.BlockSpec((Kg, Ng), lambda i: (0, 0)),   # full weight, resident
                pl.BlockSpec((1, Ng), lambda i: (0, 0)),    # bias row
            ],
            out_specs=pl.BlockSpec((tm, Ng), lambda i: (i, 0)),
        ),
        compiler_params=pltpu.CompilerParams(
            dimension_semantics=("parallel",),
            vmem_limit_bytes=vmem_limit,
        ),
        cost_estimate=cost,
    )(xg, Wg, bg)

    return out.reshape(*batch_shape, N)


# ---------------------------------------------------------------------------
# Deterministic parameter init replicating MPO.__init__ / reset_parameters
# (shapes and the std schedule; RNG is jax.random, not torch).
# ---------------------------------------------------------------------------
def init_mpo_params(key, in_feat, out_feat, array_in, array_out, bond_dim,
                    use_bias=True):
    n = len(array_in)
    weights = []
    a = 0.01
    for i in range(n):
        a = math.sqrt(a * math.sqrt(3.0 / bond_dim))
        if i == 0:
            shape = (array_in[0], array_out[0], bond_dim)
        elif i == n - 1:
            shape = (array_in[i], bond_dim, array_out[i])
        else:
            shape = (array_in[i], bond_dim, array_out[i], bond_dim)
        key, sub = jax.random.split(key)
        weights.append(jax.random.uniform(sub, shape, minval=-a, maxval=a,
                                          dtype=jnp.float32))
    bias = None
    if use_bias:
        bound = 1.0 / math.sqrt(out_feat)
        key, sub = jax.random.split(key)
        bias = jax.random.uniform(sub, (out_feat,), minval=-bound, maxval=bound,
                                  dtype=jnp.float32)
    return weights, bias


if __name__ == "__main__":
    # Small shapes consistent with the module: x is (batch, seq, in_feat).
    array_in = (4, 4, 4)      # in_feat  = 64
    array_out = (4, 4, 2)     # out_feat = 32  (< 128 -> exercises lane-dense G=4 path)
    bond_dim = 4
    in_feat = int(np.prod(array_in))
    out_feat = int(np.prod(array_out))
    B, S = 2, 8

    key = jax.random.PRNGKey(0)
    kx, kp = jax.random.split(key)
    weights, bias = init_mpo_params(kp, in_feat, out_feat, array_in, array_out,
                                    bond_dim, use_bias=True)
    x = jax.random.normal(kx, (B, S, in_feat), dtype=jnp.float32)

    # Hoist the dense W off the hot path (computed once, reused across calls).
    W = mpo_dense_weight(weights, array_in, bond_dim, in_feat, out_feat)

    # Pure-JAX reference replicating the PyTorch einsum chain exactly (+ bias).
    ref = _mpo_apply_2d(x.reshape(B * S, in_feat), weights, array_in, bond_dim,
                        out_feat).reshape(B, S, out_feat) + bias

    # f32-operand path: exact-semantics check.
    y32 = mpo_forward(x, weights, array_in, array_out, bond_dim, in_feat, out_feat,
                      bias=bias, dense_w=W, compute_dtype=jnp.float32)
    y32 = jax.block_until_ready(y32)
    np.testing.assert_allclose(np.asarray(y32), np.asarray(ref), rtol=1e-3, atol=1e-4)

    # bf16-operand / f32-accumulate path (the bandwidth-optimized production path).
    ybf = mpo_forward(x, weights, array_in, array_out, bond_dim, in_feat, out_feat,
                      bias=bias, dense_w=W, compute_dtype=jnp.bfloat16)
    ybf = jax.block_until_ready(ybf)
    np.testing.assert_allclose(np.asarray(ybf), np.asarray(ref), rtol=5e-2, atol=5e-2)

    assert y32.shape == (B, S, out_feat) and y32.dtype == jnp.float32
    print("KERNEL_OK")
</pallas_src>

<mosaic_0001>
module attributes {stable_mosaic.version = 11 : i64} {
  func.func @_mpo_matmul_kernel(%arg0: i32, %arg1: memref<4x256xf32, #tpu.memory_space<vmem>>, %arg2: memref<256x128xf32, #tpu.memory_space<vmem>>, %arg3: memref<1x128xf32, #tpu.memory_space<vmem>>, %arg4: memref<4x128xf32, #tpu.memory_space<vmem>>) attributes {dimension_semantics = [#tpu.dimension_semantics<parallel>], iteration_bounds = array<i64: 1>, scalar_prefetch = 0 : i64, scratch_operands = 0 : i64, tpu.core_type = #tpu.core_type<tc>, window_params = [{transform_indices = @transform_0, window_bounds = array<i64: 4, 256>}, {pipeline_mode = #tpu.pipeline_mode<synchronous>, transform_indices = @transform_1, window_bounds = array<i64: 256, 128>}, {pipeline_mode = #tpu.pipeline_mode<synchronous>, transform_indices = @transform_2, window_bounds = array<i64: 1, 128>}, {transform_indices = @transform_3, window_bounds = array<i64: 4, 128>}]} {
    %c0 = arith.constant 0 : index
    %c0_0 = arith.constant 0 : index
    %0 = vector.load %arg1[%c0, %c0_0] : memref<4x256xf32, #tpu.memory_space<vmem>>, vector<4x256xf32>
    %c0_1 = arith.constant 0 : index
    %c0_2 = arith.constant 0 : index
    %1 = vector.load %arg2[%c0_1, %c0_2] : memref<256x128xf32, #tpu.memory_space<vmem>>, vector<256x128xf32>
    %cst = arith.constant dense<0.000000e+00> : vector<4x128xf32>
    %2 = tpu.matmul %0, %1, %cst {dimension_numbers = #tpu.dot_dimension_numbers<[1], [0], [0], [1], [0, 0, 1, 1], [], []>} : vector<4x256xf32>, vector<256x128xf32>, vector<4x128xf32> -> vector<4x128xf32>
    %c0_3 = arith.constant 0 : index
    %c0_4 = arith.constant 0 : index
    %3 = vector.load %arg3[%c0_3, %c0_4] : memref<1x128xf32, #tpu.memory_space<vmem>>, vector<1x128xf32>
    %4 = vector.broadcast %3 : vector<1x128xf32> to vector<4x128xf32>
    %5 = arith.addf %2, %4 : vector<4x128xf32>
    %c0_5 = arith.constant 0 : index
    %c0_6 = arith.constant 0 : index
    %6 = vector.load %arg4[%c0_5, %c0_6] : memref<4x128xf32, #tpu.memory_space<vmem>>, vector<4x128xf32>
    tpu.vector_store %arg4[%c0_5, %c0_6], %5 {strides = array<i32>} : memref<4x128xf32, #tpu.memory_space<vmem>>, vector<4x128xf32>,
    return
  }
  func.func @transform_0(%arg0: i32) -> (i32, i32) {
    %c0_i32 = arith.constant 0 : i32
    %c0_i32_0 = arith.constant 0 : i32
    return %arg0, %c0_i32 : i32, i32
  }
  func.func @transform_1(%arg0: i32) -> (i32, i32) {
    %c0_i32 = arith.constant 0 : i32
    %c0_i32_0 = arith.constant 0 : i32
    %c0_i32_1 = arith.constant 0 : i32
    return %c0_i32, %c0_i32_0 : i32, i32
  }
  func.func @transform_2(%arg0: i32) -> (i32, i32) {
    %c0_i32 = arith.constant 0 : i32
    %c0_i32_0 = arith.constant 0 : i32
    %c0_i32_1 = arith.constant 0 : i32
    return %c0_i32, %c0_i32_0 : i32, i32
  }
  func.func @transform_3(%arg0: i32) -> (i32, i32) {
    %c0_i32 = arith.constant 0 : i32
    %c0_i32_0 = arith.constant 0 : i32
    return %arg0, %c0_i32 : i32, i32
  }
}

</mosaic_0001>

<llo_original>
// kernel: tpu_custom_call.1
$region0: #{tpu_custom_call.1}
  #allocation0 [shape = 'u32[]', space=smem, size = 0x4, offset = 0x4, fixed_abs, tag = 'smem constant byte address 0x4 - core index']
  #allocation1 [shape = 'u32[72,128]{1,0:T(1,128)}', space=vmem, size = 0x9000, scoped, tag = 'internal scratch']
  %s0 = inlined_call_operand.hbm [shape: f32[4,256], index: 0, kind: input, shape index: {}]
  %s1 = inlined_call_operand.hbm [shape: f32[256,128], index: 1, kind: input, shape index: {}]
  %s2 = inlined_call_operand.vmem [shape: f32[1,128], index: 2, kind: input, shape index: {}]
  %s3 = inlined_call_operand.hbm [shape: f32[4,128], index: 3, kind: output, shape index: {}]
  %s4 = sld [smem:[#allocation0]]
  $region30: #{tpu_custom_call.1} parent=0
    _
  %s6 = ssub.s32 1, %s4
  %s7 = scalar_select 0, %s6, %s4
  $region1: #{tpu_custom_call.1} parent=0
    #allocation2 [shape = 'u8[4096]{0}', space=vmem, size = 0x1000, scoped, tag = 'input window, operand 0, single buffered']
    #allocation3 [shape = 's32[1]{0}', space=sflag, size = 0x4, scoped, tag = 'scoped memory for tpu_custom_call.1']
    #allocation4 [shape = 's32[1]{0}', space=sflag, size = 0x4, scoped, tag = 'scoped memory for tpu_custom_call.1']
    #allocation5 [shape = 'u8[131072]{0}', space=vmem, size = 0x20000, scoped, tag = 'input window, operand 1, single buffered']
    #allocation6 [shape = 's32[1]{0}', space=sflag, size = 0x4, scoped, tag = 'scoped memory for tpu_custom_call.1']
    #allocation7 [shape = 'u8[2048]{0}', space=vmem, size = 0x800, scoped, tag = 'output window, operand 0, single buffered']
    %8 = vsyncpa [#allocation3], 0
    %9 = vsyncpa [#allocation6], 0
    %10 = vsyncpa [#allocation4], 0
    // Predicated region
    $region2: #{tpu_custom_call.1} parent=1 // pred_check
      _
    $region3: #{tpu_custom_call.1} parent=1 // pred_check_branch
      %12 = sbr.rel (0) target = $region5
    $region4: #{tpu_custom_call.1} parent=1 // pred_region
      %14 = vsyncadd [#allocation3], 0
      %s16 = sshll.u32 %s0, 4
      %s17 = int_to_ptr.hbm [resolvable:$true] %s16
      %s18 = sshll.u32 [#allocation2], 4
      %s19 = int_to_ptr.vmem [resolvable:$true] %s18
      %21 = dma.hbm_to_vmem [thread:$0]  %s17, 128, %s19, [#allocation3]
    $region5: #{tpu_custom_call.1} parent=1 // pred_fallthru
      _
    // Predicated region
    $region6: #{tpu_custom_call.1} parent=1 // pred_check
      _
    $region7: #{tpu_custom_call.1} parent=1 // pred_check_branch
      %23 = sbr.rel (0) target = $region9
    $region8: #{tpu_custom_call.1} parent=1 // pred_region
      %25 = vsyncadd [#allocation6], 0
      %s26 = sshll.u32 %s1, 4
      %s27 = int_to_ptr.hbm [resolvable:$true] %s26
      %s28 = sshll.u32 [#allocation5], 4
      %s29 = int_to_ptr.vmem [resolvable:$true] %s28
      %34 = dma.hbm_to_vmem [thread:$0]  %s27, 4096, %s29, [#allocation6], 128, 128, 8
    $region9: #{tpu_custom_call.1} parent=1 // pred_fallthru
      _
    // Predicated region
    $region10: #{tpu_custom_call.1} parent=1 // pred_check
      _
    $region11: #{tpu_custom_call.1} parent=1 // pred_check_branch
      %36 = sbr.rel (0) target = $region13
    $region12: #{tpu_custom_call.1} parent=1 // pred_region
      _
    $region13: #{tpu_custom_call.1} parent=1 // pred_fallthru
      _
    // Predicated region
    $region14: #{tpu_custom_call.1} parent=1 // pred_check
      _
    $region15: #{tpu_custom_call.1} parent=1 // pred_check_branch
      %38 = sbr.rel (0) target = $region17
    $region16: #{tpu_custom_call.1} parent=1 // pred_region
      %40 = dma.done [#allocation3], 128
    $region17: #{tpu_custom_call.1} parent=1 // pred_fallthru
      _
    // Predicated region
    $region18: #{tpu_custom_call.1} parent=1 // pred_check
      _
    $region19: #{tpu_custom_call.1} parent=1 // pred_check_branch
      %42 = sbr.rel (0) target = $region21
    $region20: #{tpu_custom_call.1} parent=1 // pred_region
      %44 = dma.done [#allocation6], 4096
    $region21: #{tpu_custom_call.1} parent=1 // pred_fallthru
      _
    %v45 = vld [vmem:[#allocation2] sm:$0xff]
    %v46 = vld [vmem:[#allocation5] sm:$0xff]
    %v47 = vld [vmem:[#allocation5 + $0x8] sm:$0xff]
    %v48 = vld [vmem:[#allocation5 + $0x10] sm:$0xff]
    %v49 = vld [vmem:[#allocation5 + $0x18] sm:$0xff]
    %v50 = vld [vmem:[#allocation5 + $0x20] sm:$0xff]
    %v51 = vld [vmem:[#allocation5 + $0x28] sm:$0xff]
    %v52 = vld [vmem:[#allocation5 + $0x30] sm:$0xff]
    %v53 = vld [vmem:[#allocation5 + $0x38] sm:$0xff]
    %v54 = vld [vmem:[#allocation5 + $0x40] sm:$0xff]
    %v55 = vld [vmem:[#allocation5 + $0x48] sm:$0xff]
    %v56 = vld [vmem:[#allocation5 + $0x50] sm:$0xff]
    %v57 = vld [vmem:[#allocation5 + $0x58] sm:$0xff]
    %v58 = vld [vmem:[#allocation5 + $0x60] sm:$0xff]
    %v59 = vld [vmem:[#allocation5 + $0x68] sm:$0xff]
    %v60 = vld [vmem:[#allocation5 + $0x70] sm:$0xff]
    %v61 = vld [vmem:[#allocation5 + $0x78] sm:$0xff]
    %v62 = vld [vmem:[#allocation5 + $0x80] sm:$0xff]
    %v63 = vld [vmem:[#allocation5 + $0x88] sm:$0xff]
    %v64 = vld [vmem:[#allocation5 + $0x90] sm:$0xff]
    %v65 = vld [vmem:[#allocation5 + $0x98] sm:$0xff]
    %v66 = vld [vmem:[#allocation5 + $0xa0] sm:$0xff]
    %v67 = vld [vmem:[#allocation5 + $0xa8] sm:$0xff]
    %v68 = vld [vmem:[#allocation5 + $0xb0] sm:$0xff]
    %v69 = vld [vmem:[#allocation5 + $0xb8] sm:$0xff]
    %v70 = vld [vmem:[#allocation5 + $0xc0] sm:$0xff]
    %v71 = vld [vmem:[#allocation5 + $0xc8] sm:$0xff]
    %v72 = vld [vmem:[#allocation5 + $0xd0] sm:$0xff]
    %v73 = vld [vmem:[#allocation5 + $0xd8] sm:$0xff]
    %v74 = vld [vmem:[#allocation5 + $0xe0] sm:$0xff]
    %v75 = vld [vmem:[#allocation5 + $0xe8] sm:$0xff]
    %v76 = vld [vmem:[#allocation5 + $0xf0] sm:$0xff]
    %v77 = vld [vmem:[#allocation5 + $0xf8] sm:$0xff]
    %v78 = vld [vmem:[%s2] sm:$0x1]
    %v80 = vperm.slane %v78, 0
    %83 = vst [vmem:[#allocation1] ss:$2 sm:$0xff] %v45
    %v84 = vld.sshfl [vmem:[#allocation1] sm:$0xff pattern:$0x75316420]
    %v85 = vld.sshfl [vmem:[#allocation1 + $0x8] sm:$0xff pattern:$0x75316420]
    %88 = vmatpush.msra.mxu0 %v61
    %89 = vmatpush.msra.mxu0 %v60
    %90 = vmatpush.msra.mxu0 %v59
    %91 = vmatpush.msra.mxu0 %v58
    %92 = vmatpush.msra.mxu0 %v57
    %93 = vmatpush.msra.mxu0 %v56
    %94 = vmatpush.msra.mxu0 %v55
    %95 = vmatpush.msra.mxu0 %v54
    %96 = vmatpush.msra.mxu0 %v53
    %97 = vmatpush.msra.mxu0 %v52
    %98 = vmatpush.msra.mxu0 %v51
    %99 = vmatpush.msra.mxu0 %v50
    %100 = vmatpush.msra.mxu0 %v49
    %101 = vmatpush.msra.mxu0 %v48
    %102 = vmatpush.msra.mxu0 %v47
    %103 = vmatpush.msra.mxu0 %v46
    %104 = vmatmul.f32.gmra.mxu0 %v84
    %v105 = vpop.f32.mrf.mxu0
    %v106 = vadd.f32 %v80, %v105
    %107 = vdwg.mxu0
    %108 = vmatpush.msra.mxu0 %v77
    %109 = vmatpush.msra.mxu0 %v76
    %110 = vmatpush.msra.mxu0 %v75
    %111 = vmatpush.msra.mxu0 %v74
    %112 = vmatpush.msra.mxu0 %v73
    %113 = vmatpush.msra.mxu0 %v72
    %114 = vmatpush.msra.mxu0 %v71
    %115 = vmatpush.msra.mxu0 %v70
    %116 = vmatpush.msra.mxu0 %v69
    %117 = vmatpush.msra.mxu0 %v68
    %118 = vmatpush.msra.mxu0 %v67
    %119 = vmatpush.msra.mxu0 %v66
    %120 = vmatpush.msra.mxu0 %v65
    %121 = vmatpush.msra.mxu0 %v64
    %122 = vmatpush.msra.mxu0 %v63
    %123 = vmatpush.msra.mxu0 %v62
    %124 = vmatmul.f32.gmra.mxu0 %v85
    %v125 = vpop.f32.mrf.mxu0
    %v126 = vadd.f32 %v106, %v125
    %127 = vdwg.mxu0
    %128 = vst [vmem:[#allocation7] sm:$0xf] %v126
    // Predicated region
    $region22: #{tpu_custom_call.1} parent=1 // pred_check
      _
    $region23: #{tpu_custom_call.1} parent=1 // pred_check_branch
      %130 = sbr.rel (0) target = $region25
    $region24: #{tpu_custom_call.1} parent=1 // pred_region
      %132 = vsyncadd [#allocation4], 0
      %s134 = sshll.u32 [#allocation7], 4
      %s135 = int_to_ptr.vmem [resolvable:$true] %s134
      %s136 = sshll.u32 %s3, 4
      %s137 = int_to_ptr.hbm [resolvable:$true] %s136
      %139 = dma.vmem_to_hbm [thread:$0]  %s135, 64, %s137, [#allocation4]
    $region25: #{tpu_custom_call.1} parent=1 // pred_fallthru
      _
    // Predicated region
    $region26: #{tpu_custom_call.1} parent=1 // pred_check
      _
    $region27: #{tpu_custom_call.1} parent=1 // pred_check_branch
      %141 = sbr.rel (0) target = $region29
    $region28: #{tpu_custom_call.1} parent=1 // pred_region
      %143 = dma.done [#allocation4], 64
    $region29: #{tpu_custom_call.1} parent=1 // pred_fallthru
      _
    %144 = vsyncpa [#allocation3], 1
    %145 = vsyncpa [#allocation6], 1
    %146 = vsyncpa [#allocation4], 1

</llo_original>
